<compile_context>
chip_gen: v5e
topology: v5e:2x2
jax: 0.10.0
libtpu: 0.0.40
codegen_flags: <defaults>
</compile_context>

<pallas_src>
import functools

import jax
import jax.numpy as jnp
from jax.experimental import pallas as pl
from jax.experimental.pallas import tpu as pltpu


def make_lightgcn_prop_kernel(n_layers):
    """Kernel refs: adj_ref [1,N,N] bf16, emb_ref [1,N,D] f32, out_ref [1,N,D] f32.

    Grid step c selects chain c (0: user chain with A, 1: item chain with A^T)
    purely via the BlockSpec index_maps; the kernel body is chain-agnostic.
    """

    def kernel(adj_ref, emb_ref, out_ref):
        adj = adj_ref[0]                    # [N, N] bf16, resident in VMEM
        e = emb_ref[0]                      # [N, D] f32, layer-0 embedding
        acc = e                             # running sum over layers (f32)
        for _ in range(n_layers):           # unrolled; n_layers is static
            e = jnp.dot(adj, e.astype(jnp.bfloat16),
                        preferred_element_type=jnp.float32)
            acc = acc + e
        out_ref[0] = acc * (1.0 / float(n_layers + 1))   # mean over layers

    return kernel


def init_lightgcn_params(key, n_users, n_items, embedding_size):
    """nn.Embedding weights with normal(std=0.1) init, as in the module."""
    ku, ki = jax.random.split(key)
    return {
        "emb_user": jax.random.normal(ku, (n_users, embedding_size), jnp.float32) * 0.1,
        "emb_item": jax.random.normal(ki, (n_items, embedding_size), jnp.float32) * 0.1,
    }


def build_normalized_adjacency(key, n_users, n_items, n_interactions):
    """Dense analogue of LightGCN.compute_adjacency_matrix: D^-1/2 (A+A^T) D^-1/2."""
    n_nodes = n_users + n_items
    ku, ki, kr = jax.random.split(key, 3)
    u_idx = jax.random.randint(ku, (n_interactions,), 0, n_users)
    i_idx = jax.random.randint(ki, (n_interactions,), 0, n_items) + n_users
    ratings = jax.random.randint(kr, (n_interactions,), 1, 6).astype(jnp.float32)
    a = jnp.zeros((n_nodes, n_nodes), jnp.float32).at[u_idx, i_idx].add(ratings)
    a_sym = a + a.T
    rowsum = a_sym.sum(axis=1)
    d_inv_sqrt = jnp.where(rowsum > 0.0,
                           1.0 / jnp.sqrt(jnp.maximum(rowsum, 1e-12)), 0.0)
    return d_inv_sqrt[:, None] * a_sym * d_inv_sqrt[None, :]


@functools.partial(jax.jit, static_argnames=("n_layers", "scale_back_to_ratings",
                                             "min_rating", "max_rating"))
def lightgcn_forward(user_indices, item_indices, adj, params, n_layers,
                     scale_back_to_ratings=False, min_rating=1.0, max_rating=5.0):
    # --- glue: embedding gather (tiny vs the O(N^2) adjacency traffic) ---
    user_emb = jnp.take(params["emb_user"], user_indices, axis=0)   # [B, D]
    item_emb = jnp.take(params["emb_item"], item_indices, axis=0)   # [B, D]

    n_nodes = adj.shape[0]
    batch, emb_dim = user_emb.shape
    assert adj.shape == (n_nodes, n_nodes)
    assert batch == n_nodes, (
        "LightGCN's forward (torch.sparse.mm(adj, user_emb)) requires "
        "len(indices) == n_users + n_items == adj.shape[0]")

    # Stack the two independent propagation chains along a leading axis that
    # becomes the parallel grid axis: chain 0 uses A, chain 1 uses A^T.
    adj_stack = jnp.stack([adj, adj.T], axis=0).astype(jnp.bfloat16)   # [2, N, N]
    emb_stack = jnp.stack([user_emb, item_emb], axis=0)                # [2, N, D]

    kernel = make_lightgcn_prop_kernel(n_layers)

    # VMEM budget: adjacency block (bf16) + in/out embedding slabs, with
    # double-buffering + in-kernel live values.  Derived per shape so the same
    # code stays inside v7x's 64 MiB physical VMEM.
    block_bytes = 2 * n_nodes * n_nodes + 2 * 4 * n_nodes * emb_dim
    vmem_limit = int(max(16 << 20, min(64 << 20, 6 * block_bytes + (4 << 20))))

    flops = 2 * 2 * n_layers * n_nodes * n_nodes * emb_dim
    bytes_accessed = int(adj_stack.size * 2 + emb_stack.size * 4
                         + 2 * n_nodes * emb_dim * 4)

    final_emb = pl.pallas_call(
        kernel,
        out_shape=jax.ShapeDtypeStruct((2, n_nodes, emb_dim), jnp.float32),
        grid=(2,),
        in_specs=[
            pl.BlockSpec((1, n_nodes, n_nodes), lambda c: (c, 0, 0)),
            pl.BlockSpec((1, n_nodes, emb_dim), lambda c: (c, 0, 0)),
        ],
        out_specs=pl.BlockSpec((1, n_nodes, emb_dim), lambda c: (c, 0, 0)),
        compiler_params=pltpu.CompilerParams(
            dimension_semantics=("parallel",),
            vmem_limit_bytes=vmem_limit),
        cost_estimate=pl.CostEstimate(flops=flops, transcendentals=0,
                                      bytes_accessed=bytes_accessed),
    )(adj_stack, emb_stack)                                            # [2, N, D]

    # Row-wise dot product + sigmoid stay in XLA: the kernel emits the
    # lane-dense [2, N, D] slab instead of a last-dim-1 (masked-store) output.
    scores = jnp.sum(final_emb[0] * final_emb[1], axis=-1)             # [B]
    preds = jax.nn.sigmoid(scores)
    if scale_back_to_ratings:
        preds = jnp.round(preds * (max_rating - min_rating) + min_rating)
    return preds


def lightgcn_forward_ref(user_indices, item_indices, adj, params, n_layers):
    """Pure-JAX f32 reference mirroring the PyTorch forward."""
    u = jnp.take(params["emb_user"], user_indices, axis=0)
    it = jnp.take(params["emb_item"], item_indices, axis=0)
    all_u, all_i = [u], [it]
    for _ in range(n_layers):
        u = adj @ u
        it = adj.T @ it
        all_u.append(u)
        all_i.append(it)
    final_u = jnp.mean(jnp.stack(all_u, axis=1), axis=1)
    final_i = jnp.mean(jnp.stack(all_i, axis=1), axis=1)
    return jax.nn.sigmoid(jnp.sum(final_u * final_i, axis=1))


if __name__ == "__main__":
    # Small, module-consistent shapes: N = n_users + n_items = 128 nodes,
    # embedding_size 64, 3 propagation layers, batch == N (required by the
    # module's forward math).
    n_users, n_items = 48, 80
    embedding_size = 64
    n_layers = 3
    min_rating, max_rating = 1.0, 5.0
    n_nodes = n_users + n_items
    batch = n_nodes

    key = jax.random.PRNGKey(0)
    k_params, k_adj, k_ui, k_ii = jax.random.split(key, 4)
    params = init_lightgcn_params(k_params, n_users, n_items, embedding_size)
    adj = build_normalized_adjacency(k_adj, n_users, n_items, n_interactions=512)
    user_indices = jax.random.randint(k_ui, (batch,), 0, n_users, dtype=jnp.int32)
    item_indices = jax.random.randint(k_ii, (batch,), 0, n_items, dtype=jnp.int32)

    preds = lightgcn_forward(user_indices, item_indices, adj, params, n_layers)
    preds = jax.block_until_ready(preds)

    ref = lightgcn_forward_ref(user_indices, item_indices, adj, params, n_layers)
    assert preds.shape == (batch,)
    # Kernel uses bf16 adjacency/activations with f32 accumulation vs the f32
    # reference -> loose tolerance as recommended in the review.
    assert jnp.allclose(preds, ref, atol=2e-2, rtol=2e-2), (
        f"mismatch vs reference; max abs diff = {jnp.max(jnp.abs(preds - ref))}")

    # Exercise the scale_back_to_ratings path once as well.
    ratings = jax.block_until_ready(
        lightgcn_forward(user_indices, item_indices, adj, params, n_layers,
                         scale_back_to_ratings=True,
                         min_rating=min_rating, max_rating=max_rating))
    assert ratings.shape == (batch,)

    print("KERNEL_OK")
</pallas_src>

<mosaic_0001>
module attributes {stable_mosaic.version = 11 : i64} {
  func.func @kernel(%arg0: i32, %arg1: memref<1x128x128xbf16, #tpu.memory_space<vmem>>, %arg2: memref<1x128x64xf32, #tpu.memory_space<vmem>>, %arg3: memref<1x128x64xf32, #tpu.memory_space<vmem>>) attributes {dimension_semantics = [#tpu.dimension_semantics<parallel>], iteration_bounds = array<i64: 2>, scalar_prefetch = 0 : i64, scratch_operands = 0 : i64, tpu.core_type = #tpu.core_type<tc>, window_params = [{transform_indices = @transform_0, window_bounds = array<i64: 1, 128, 128>}, {transform_indices = @transform_1, window_bounds = array<i64: 1, 128, 64>}, {transform_indices = @transform_2, window_bounds = array<i64: 1, 128, 64>}]} {
    %c0 = arith.constant 0 : index
    %c0_0 = arith.constant 0 : index
    %c0_1 = arith.constant 0 : index
    %0 = vector.load %arg1[%c0, %c0_0, %c0_1] : memref<1x128x128xbf16, #tpu.memory_space<vmem>>, vector<1x128x128xbf16>
    %1 = vector.shape_cast %0 : vector<1x128x128xbf16> to vector<128x128xbf16>
    %c0_2 = arith.constant 0 : index
    %c0_3 = arith.constant 0 : index
    %c0_4 = arith.constant 0 : index
    %2 = vector.load %arg2[%c0_2, %c0_3, %c0_4] : memref<1x128x64xf32, #tpu.memory_space<vmem>>, vector<1x128x64xf32>
    %3 = vector.shape_cast %2 : vector<1x128x64xf32> to vector<128x64xf32>
    %4 = arith.truncf %3 : vector<128x64xf32> to vector<128x64xbf16>
    %cst = arith.constant dense<0.000000e+00> : vector<128x64xf32>
    %5 = tpu.matmul %1, %4, %cst {dimension_numbers = #tpu.dot_dimension_numbers<[1], [0], [0], [1], [0, 0, 1, 1], [], []>} : vector<128x128xbf16>, vector<128x64xbf16>, vector<128x64xf32> -> vector<128x64xf32>
    %6 = arith.addf %3, %5 : vector<128x64xf32>
    %7 = arith.truncf %5 : vector<128x64xf32> to vector<128x64xbf16>
    %cst_5 = arith.constant dense<0.000000e+00> : vector<128x64xf32>
    %8 = tpu.matmul %1, %7, %cst_5 {dimension_numbers = #tpu.dot_dimension_numbers<[1], [0], [0], [1], [0, 0, 1, 1], [], []>} : vector<128x128xbf16>, vector<128x64xbf16>, vector<128x64xf32> -> vector<128x64xf32>
    %9 = arith.addf %6, %8 : vector<128x64xf32>
    %10 = arith.truncf %8 : vector<128x64xf32> to vector<128x64xbf16>
    %cst_6 = arith.constant dense<0.000000e+00> : vector<128x64xf32>
    %11 = tpu.matmul %1, %10, %cst_6 {dimension_numbers = #tpu.dot_dimension_numbers<[1], [0], [0], [1], [0, 0, 1, 1], [], []>} : vector<128x128xbf16>, vector<128x64xbf16>, vector<128x64xf32> -> vector<128x64xf32>
    %12 = arith.addf %9, %11 : vector<128x64xf32>
    %cst_7 = arith.constant 2.500000e-01 : f32
    %13 = vector.broadcast %cst_7 : f32 to vector<128x64xf32>
    %14 = arith.mulf %12, %13 : vector<128x64xf32>
    %c0_8 = arith.constant 0 : index
    %c0_9 = arith.constant 0 : index
    %c0_10 = arith.constant 0 : index
    %15 = vector.load %arg3[%c0_8, %c0_9, %c0_10] : memref<1x128x64xf32, #tpu.memory_space<vmem>>, vector<1x128x64xf32>
    %16 = vector.shape_cast %15 : vector<1x128x64xf32> to vector<128x64xf32>
    %17 = vector.shape_cast %14 : vector<128x64xf32> to vector<1x128x64xf32>
    tpu.vector_store %arg3[%c0_8, %c0_9, %c0_10], %17 {strides = array<i32>} : memref<1x128x64xf32, #tpu.memory_space<vmem>>, vector<1x128x64xf32>,
    return
  }
  func.func @transform_0(%arg0: i32) -> (i32, i32, i32) {
    %c0_i32 = arith.constant 0 : i32
    %c0_i32_0 = arith.constant 0 : i32
    %c0_i32_1 = arith.constant 0 : i32
    return %arg0, %c0_i32, %c0_i32_0 : i32, i32, i32
  }
  func.func @transform_1(%arg0: i32) -> (i32, i32, i32) {
    %c0_i32 = arith.constant 0 : i32
    %c0_i32_0 = arith.constant 0 : i32
    %c0_i32_1 = arith.constant 0 : i32
    return %arg0, %c0_i32, %c0_i32_0 : i32, i32, i32
  }
  func.func @transform_2(%arg0: i32) -> (i32, i32, i32) {
    %c0_i32 = arith.constant 0 : i32
    %c0_i32_0 = arith.constant 0 : i32
    %c0_i32_1 = arith.constant 0 : i32
    return %arg0, %c0_i32, %c0_i32_0 : i32, i32, i32
  }
}

</mosaic_0001>

<llo_original>
// kernel: lightgcn_forward.1
$region0: #{lightgcn_forward.1}
  #allocation0 [shape = 'u32[]', space=smem, size = 0x4, offset = 0x4, fixed_abs, tag = 'smem constant byte address 0x4 - core index']
  #allocation1 [shape = 'u32[72,128]{1,0:T(1,128)}', space=vmem, size = 0x9000, scoped, tag = 'internal scratch']
  %s0 = inlined_call_operand.vmem [shape: bf16[2,128,128], index: 0, kind: input, shape index: {}]
  %s1 = inlined_call_operand.vmem [shape: f32[2,128,64], index: 1, kind: input, shape index: {}]
  %s2 = inlined_call_operand.vmem [shape: f32[2,128,64], index: 2, kind: output, shape index: {}]
  %s3 = sld [smem:[#allocation0]]
  $region41: #{lightgcn_forward.1} parent=0
    _
  %s5 = ssub.s32 1, %s3
  %s6 = scalar_select 0, %s5, %s3
  loop: start=0, step=1, limit=4
  $region2: #{lightgcn_forward.1} parent=0 // loop_pre_header
    _
  $region3: #{lightgcn_forward.1} parent=0 // loop_header
    %s8 = sphi 0, %s12
    %p9 = scmp.ge.s32.totalorder %s8, 4
    %s18 = sphi 0, %s20
    %s21 = sphi 0, %s18
    %s22 = sphi 0, %s21
    %s38 = sphi 0, %s22
    %s44 = sphi 0, %s46
    %s47 = sphi 0, %s44
    %s48 = sphi 0, %s47
    %s64 = sphi 0, %s48
    %s70 = sphi 0, %s72
    %s73 = sphi 0, %s70
    %s74 = sphi 0, %s73
    %s90 = sphi 0, %s74
  $region4: #{lightgcn_forward.1} parent=0 // loop_header_branch
    %11 = sbr.rel (%p9) target = $region8
  $region5: #{lightgcn_forward.1} parent=0 // loop_body
    %s13 = ssub.s32 %s8, 1
    %s14 = ssub.s32 %s8, 2
    %s15 = sadd.s32 %s8, 1
    %s16 = ssub.s32 %s8, %s15
    %p17 = scmp.eq.s32.totalorder %s16, 0
    %s19 = sadd.s32 %s18, 1
    %s20 = scalar_select %p17, %s18, %s19
    %p23 = pneg %p17
    %p24 = scmp.eq.s32.totalorder %s8, 1
    %p25 = por %p23, %p24
    %p26 = scmp.ne.s32.totalorder %s18, %s21
    %p27 = scmp.eq.s32.totalorder %s8, 0
    %p28 = por %p26, %p27
    %p29 = scmp.ne.s32.totalorder %s18, %s21
    %p30 = scmp.eq.s32.totalorder %s13, 1
    %p31 = por %p29, %p30
    %p32 = scmp.ne.s32.totalorder %s21, %s22
    %p33 = scmp.eq.s32.totalorder %s13, 0
    %p34 = por %p32, %p33
    %p35 = scmp.ne.s32.totalorder %s21, %s22
    %p36 = scmp.eq.s32.totalorder %s14, 1
    %p37 = por %p35, %p36
    %p39 = scmp.ne.s32.totalorder %s22, %s38
    %p40 = scmp.eq.s32.totalorder %s14, 0
    %p41 = por %p39, %p40
    %s42 = ssub.s32 %s8, %s15
    %p43 = scmp.eq.s32.totalorder %s42, 0
    %s45 = sadd.s32 %s44, 1
    %s46 = scalar_select %p43, %s44, %s45
    %p49 = pneg %p43
    %p50 = scmp.eq.s32.totalorder %s8, 1
    %p51 = por %p49, %p50
    %p52 = scmp.ne.s32.totalorder %s44, %s47
    %p53 = scmp.eq.s32.totalorder %s8, 0
    %p54 = por %p52, %p53
    %p55 = scmp.ne.s32.totalorder %s44, %s47
    %p56 = scmp.eq.s32.totalorder %s13, 1
    %p57 = por %p55, %p56
    %p58 = scmp.ne.s32.totalorder %s47, %s48
    %p59 = scmp.eq.s32.totalorder %s13, 0
    %p60 = por %p58, %p59
    %p61 = scmp.ne.s32.totalorder %s47, %s48
    %p62 = scmp.eq.s32.totalorder %s14, 1
    %p63 = por %p61, %p62
    %p65 = scmp.ne.s32.totalorder %s48, %s64
    %p66 = scmp.eq.s32.totalorder %s14, 0
    %p67 = por %p65, %p66
    %s68 = ssub.s32 %s8, %s15
    %p69 = scmp.eq.s32.totalorder %s68, 0
    %s71 = sadd.s32 %s70, 1
    %s72 = scalar_select %p69, %s70, %s71
    %p75 = pneg %p69
    %p76 = scmp.eq.s32.totalorder %s8, 1
    %p77 = por %p75, %p76
    %p78 = scmp.ne.s32.totalorder %s70, %s73
    %p79 = scmp.eq.s32.totalorder %s8, 0
    %p80 = por %p78, %p79
    %p81 = scmp.ne.s32.totalorder %s70, %s73
    %p82 = scmp.eq.s32.totalorder %s13, 1
    %p83 = por %p81, %p82
    %p84 = scmp.ne.s32.totalorder %s73, %s74
    %p85 = scmp.eq.s32.totalorder %s13, 0
    %p86 = por %p84, %p85
    %p87 = scmp.ne.s32.totalorder %s73, %s74
    %p88 = scmp.eq.s32.totalorder %s14, 1
    %p89 = por %p87, %p88
    %p91 = scmp.ne.s32.totalorder %s74, %s90
    %p92 = scmp.eq.s32.totalorder %s14, 0
    %p93 = por %p91, %p92
    %p94 = scmp.le.s32.totalorder 1, %s8
    %p95 = scmp.lt.s32.totalorder %s8, 3
    %p96 = pnand %p94, %p95
    %p97 = pneg %p96
    // Predicated region
    $region9: #{lightgcn_forward.1} parent=5 // pred_check
      _
    $region10: #{lightgcn_forward.1} parent=5 // pred_check_branch
      %99 = sbr.rel (%p96) target = $region12
    $region11: #{lightgcn_forward.1} parent=5 // pred_region
      %s100 = ssub.s32 %s8, 1
    $region12: #{lightgcn_forward.1} parent=5 // pred_fallthru
      _
    %p101 = scmp.lt.s32.totalorder %s8, 2
    // Predicated region
    $region13: #{lightgcn_forward.1} parent=5 // pred_check
      %p102 = pneg %p101
    $region14: #{lightgcn_forward.1} parent=5 // pred_check_branch
      %104 = sbr.rel (%p102) target = $region16
    $region15: #{lightgcn_forward.1} parent=5 // pred_region
      // Predicated region
      $region17: #{lightgcn_forward.1} parent=15 // pred_check
        %p105 = pneg %p28
      $region18: #{lightgcn_forward.1} parent=15 // pred_check_branch
        %107 = sbr.rel (%p105) target = $region20
      $region19: #{lightgcn_forward.1} parent=15 // pred_region
        %p108 = scmp.lt.s32.totalorder %s8, 1
        %s109 = scalar_select %p108, %s8, 1
        %s110 = smul.addr %s109, 16
        %s111 = smul.addr %s110, 4
        %s112 = scalar_lea.vmem %s0, %s111
      $region20: #{lightgcn_forward.1} parent=15 // pred_fallthru
        _
      // Predicated region
      $region21: #{lightgcn_forward.1} parent=15 // pred_check
        %p113 = pneg %p54
      $region22: #{lightgcn_forward.1} parent=15 // pred_check_branch
        %115 = sbr.rel (%p113) target = $region24
      $region23: #{lightgcn_forward.1} parent=15 // pred_region
        %p116 = scmp.lt.s32.totalorder %s8, 1
        %s117 = scalar_select %p116, %s8, 1
        %s118 = smul.addr %s117, 16
        %s119 = smul.addr %s118, 8
        %s120 = scalar_lea.vmem %s1, %s119
      $region24: #{lightgcn_forward.1} parent=15 // pred_fallthru
        _
    $region16: #{lightgcn_forward.1} parent=5 // pred_fallthru
      _
    %p121 = scmp.le.s32.totalorder 1, %s8
    %p122 = scmp.lt.s32.totalorder %s8, 3
    %p123 = pnand %p121, %p122
    %p124 = pneg %p123
    // Predicated region
    $region25: #{lightgcn_forward.1} parent=5 // pred_check
      _
    $region26: #{lightgcn_forward.1} parent=5 // pred_check_branch
      %126 = sbr.rel (%p123) target = $region28
    $region27: #{lightgcn_forward.1} parent=5 // pred_region
      %s127 = ssub.s32 %s8, 1
      %p128 = scmp.lt.s32.totalorder %s13, 1
      %s129 = scalar_select %p128, %s13, 1
      %s130 = smul.addr %s129, 16
      %s131 = smul.addr %s130, 4
      %s132 = scalar_lea.vmem %s0, %s131
      %p133 = pneg %p34
      %p134 = pneg %p31
      %p135 = scmp.lt.s32.totalorder %s13, 1
      %s136 = scalar_select %p135, %s13, 1
      %s137 = smul.addr %s136, 16
      %s138 = smul.addr %s137, 8
      %s139 = scalar_lea.vmem %s1, %s138
      %p140 = pneg %p60
      %p141 = pneg %p57
      %p142 = pneg %p86
      %p143 = pneg %p83
      %p144 = scmp.lt.s32.totalorder %s13, 1
      %s145 = scalar_select %p144, %s13, 1
      %s146 = smul.addr %s145, 16
      %s147 = smul.addr %s146, 8
      %s148 = scalar_lea.vmem %s2, %s147
      %p149 = scmp.lt.s32.totalorder %s13, 1
      %s150 = scalar_select %p149, %s13, 1
      %s151 = smul.addr %s150, 16
      %s152 = smul.addr %s151, 4
      %s153 = scalar_lea.vmem %s0, %s152
      %p154 = scmp.lt.s32.totalorder %s13, 1
      %s155 = scalar_select %p154, %s13, 1
      %s156 = smul.addr %s155, 16
      %s157 = smul.addr %s156, 8
      %s158 = scalar_lea.vmem %s1, %s157
      %p159 = scmp.lt.s32.totalorder %s13, 1
      %s160 = scalar_select %p159, %s13, 1
      %s161 = smul.addr %s160, 16
      %s162 = smul.addr %s161, 8
      %s163 = scalar_lea.vmem %s2, %s162
      %v164 = vld [vmem:[%s153] sm:$0xf]
      %v165 = vld [vmem:[%s153 + $0x4] sm:$0xf]
      %v166 = vld [vmem:[%s153 + $0x8] sm:$0xf]
      %v167 = vld [vmem:[%s153 + $0xc] sm:$0xf]
      %v168 = vld [vmem:[%s153 + $0x10] sm:$0xf]
      %v169 = vld [vmem:[%s153 + $0x14] sm:$0xf]
      %v170 = vld [vmem:[%s153 + $0x18] sm:$0xf]
      %v171 = vld [vmem:[%s153 + $0x1c] sm:$0xf]
      %v172 = vld [vmem:[%s153 + $0x20] sm:$0xf]
      %v173 = vld [vmem:[%s153 + $0x24] sm:$0xf]
      %v174 = vld [vmem:[%s153 + $0x28] sm:$0xf]
      %v175 = vld [vmem:[%s153 + $0x2c] sm:$0xf]
      %v176 = vld [vmem:[%s153 + $0x30] sm:$0xf]
      %v177 = vld [vmem:[%s153 + $0x34] sm:$0xf]
      %v178 = vld [vmem:[%s153 + $0x38] sm:$0xf]
      %v179 = vld [vmem:[%s153 + $0x3c] sm:$0xf]
      %v180 = vld [vmem:[%s158] sm:$0xff]
      %v181 = vld [vmem:[%s158 + $0x8] sm:$0xff]
      %v182 = vld [vmem:[%s158 + $0x10] sm:$0xff]
      %v183 = vld [vmem:[%s158 + $0x18] sm:$0xff]
      %v184 = vld [vmem:[%s158 + $0x20] sm:$0xff]
      %v185 = vld [vmem:[%s158 + $0x28] sm:$0xff]
      %v186 = vld [vmem:[%s158 + $0x30] sm:$0xff]
      %v187 = vld [vmem:[%s158 + $0x38] sm:$0xff]
      %v188 = vld [vmem:[%s158 + $0x40] sm:$0xff]
      %v189 = vld [vmem:[%s158 + $0x48] sm:$0xff]
      %v190 = vld [vmem:[%s158 + $0x50] sm:$0xff]
      %v191 = vld [vmem:[%s158 + $0x58] sm:$0xff]
      %v192 = vld [vmem:[%s158 + $0x60] sm:$0xff]
      %v193 = vld [vmem:[%s158 + $0x68] sm:$0xff]
      %v194 = vld [vmem:[%s158 + $0x70] sm:$0xff]
      %v195 = vld [vmem:[%s158 + $0x78] sm:$0xff]
      %v196 = vpack.c.bf16 %v181, %v180
      %v197 = vpack.c.bf16 %v183, %v182
      %v198 = vpack.c.bf16 %v185, %v184
      %v199 = vpack.c.bf16 %v187, %v186
      %v200 = vpack.c.bf16 %v189, %v188
      %v201 = vpack.c.bf16 %v191, %v190
      %v202 = vpack.c.bf16 %v193, %v192
      %v203 = vpack.c.bf16 %v195, %v194
      %v220 = vunpack.c.l.b16 %v164
      %v221 = vunpack.c.l.b16 %v165
      %v222 = vunpack.c.l.b16 %v166
      %v223 = vunpack.c.l.b16 %v167
      %v224 = vunpack.c.l.b16 %v168
      %v225 = vunpack.c.l.b16 %v169
      %v226 = vunpack.c.l.b16 %v170
      %v227 = vunpack.c.l.b16 %v171
      %v228 = vunpack.c.l.b16 %v172
      %v229 = vunpack.c.l.b16 %v173
      %v230 = vunpack.c.l.b16 %v174
      %v231 = vunpack.c.l.b16 %v175
      %v232 = vunpack.c.l.b16 %v176
      %v233 = vunpack.c.l.b16 %v177
      %v234 = vunpack.c.l.b16 %v178
      %v235 = vunpack.c.l.b16 %v179
      %v236 = vpack.c.b16 %v221, %v220
      %v237 = vpack.c.b16 %v223, %v222
      %v238 = vpack.c.b16 %v225, %v224
      %v239 = vpack.c.b16 %v227, %v226
      %v240 = vpack.c.b16 %v229, %v228
      %v241 = vpack.c.b16 %v231, %v230
      %v242 = vpack.c.b16 %v233, %v232
      %v243 = vpack.c.b16 %v235, %v234
      %252 = vmatpush.bf16.msra.mxu0 %v203
      %253 = vmatpush.bf16.msra.mxu0 %v202
      %254 = vmatpush.bf16.msra.mxu0 %v201
      %255 = vmatpush.bf16.msra.mxu0 %v200
      %256 = vmatpush.bf16.msra.mxu0 %v199
      %257 = vmatpush.bf16.msra.mxu0 %v198
      %258 = vmatpush.bf16.msra.mxu0 %v197
      %259 = vmatpush.bf16.msra.mxu0 %v196
      %260 = vmatmul.bf16.gmra.mxu0 %v236
      %v261 = vpop.f32.mrf.mxu0
      %v262 = vadd.f32 0.0, %v261
      %v263 = vpop.f32.mrf.mxu0
      %v264 = vadd.f32 0.0, %v263
      %265 = vmatmul.bf16.gmra.mxu0 %v237
      %v266 = vpop.f32.mrf.mxu0
      %v267 = vadd.f32 0.0, %v266
      %v268 = vpop.f32.mrf.mxu0
      %v269 = vadd.f32 0.0, %v268
      %270 = vmatmul.bf16.gmra.mxu0 %v238
      %v271 = vpop.f32.mrf.mxu0
      %v272 = vadd.f32 0.0, %v271
      %v273 = vpop.f32.mrf.mxu0
      %v274 = vadd.f32 0.0, %v273
      %275 = vmatmul.bf16.gmra.mxu0 %v239
      %v276 = vpop.f32.mrf.mxu0
      %v277 = vadd.f32 0.0, %v276
      %v278 = vpop.f32.mrf.mxu0
      %v279 = vadd.f32 0.0, %v278
      %280 = vmatmul.bf16.gmra.mxu0 %v240
      %v281 = vpop.f32.mrf.mxu0
      %v282 = vadd.f32 0.0, %v281
      %v283 = vpop.f32.mrf.mxu0
      %v284 = vadd.f32 0.0, %v283
      %285 = vmatmul.bf16.gmra.mxu0 %v241
      %v286 = vpop.f32.mrf.mxu0
      %v287 = vadd.f32 0.0, %v286
      %v288 = vpop.f32.mrf.mxu0
      %v289 = vadd.f32 0.0, %v288
      %290 = vmatmul.bf16.gmra.mxu0 %v242
      %v291 = vpop.f32.mrf.mxu0
      %v292 = vadd.f32 0.0, %v291
      %v293 = vpop.f32.mrf.mxu0
      %v294 = vadd.f32 0.0, %v293
      %295 = vmatmul.bf16.gmra.mxu0 %v243
      %v296 = vpop.f32.mrf.mxu0
      %v297 = vadd.f32 0.0, %v296
      %v298 = vpop.f32.mrf.mxu0
      %v299 = vadd.f32 0.0, %v298
      %300 = vdwg.mxu0
      %v301 = vadd.f32 %v180, %v262
      %v302 = vadd.f32 %v181, %v264
      %v303 = vadd.f32 %v182, %v267
      %v304 = vadd.f32 %v183, %v269
      %v305 = vadd.f32 %v184, %v272
      %v306 = vadd.f32 %v185, %v274
      %v307 = vadd.f32 %v186, %v277
      %v308 = vadd.f32 %v187, %v279
      %v309 = vadd.f32 %v188, %v282
      %v310 = vadd.f32 %v189, %v284
      %v311 = vadd.f32 %v190, %v287
      %v312 = vadd.f32 %v191, %v289
      %v313 = vadd.f32 %v192, %v292
      %v314 = vadd.f32 %v193, %v294
      %v315 = vadd.f32 %v194, %v297
      %v316 = vadd.f32 %v195, %v299
      %v317 = vpack.c.bf16 %v264, %v262
      %v318 = vpack.c.bf16 %v269, %v267
      %v319 = vpack.c.bf16 %v274, %v272
      %v320 = vpack.c.bf16 %v279, %v277
      %v321 = vpack.c.bf16 %v284, %v282
      %v322 = vpack.c.bf16 %v289, %v287
      %v323 = vpack.c.bf16 %v294, %v292
      %v324 = vpack.c.bf16 %v299, %v297
      %325 = vmatpush.bf16.msra.mxu0 %v324
      %326 = vmatpush.bf16.msra.mxu0 %v323
      %327 = vmatpush.bf16.msra.mxu0 %v322
      %328 = vmatpush.bf16.msra.mxu0 %v321
      %329 = vmatpush.bf16.msra.mxu0 %v320
      %330 = vmatpush.bf16.msra.mxu0 %v319
      %331 = vmatpush.bf16.msra.mxu0 %v318
      %332 = vmatpush.bf16.msra.mxu0 %v317
      %333 = vmatmul.bf16.gmra.mxu0 %v236
      %v334 = vpop.f32.mrf.mxu0
      %v335 = vadd.f32 0.0, %v334
      %v336 = vpop.f32.mrf.mxu0
      %v337 = vadd.f32 0.0, %v336
      %338 = vmatmul.bf16.gmra.mxu0 %v237
      %v339 = vpop.f32.mrf.mxu0
      %v340 = vadd.f32 0.0, %v339
      %v341 = vpop.f32.mrf.mxu0
      %v342 = vadd.f32 0.0, %v341
      %343 = vmatmul.bf16.gmra.mxu0 %v238
      %v344 = vpop.f32.mrf.mxu0
      %v345 = vadd.f32 0.0, %v344
      %v346 = vpop.f32.mrf.mxu0
      %v347 = vadd.f32 0.0, %v346
      %348 = vmatmul.bf16.gmra.mxu0 %v239
      %v349 = vpop.f32.mrf.mxu0
      %v350 = vadd.f32 0.0, %v349
      %v351 = vpop.f32.mrf.mxu0
      %v352 = vadd.f32 0.0, %v351
      %353 = vmatmul.bf16.gmra.mxu0 %v240
      %v354 = vpop.f32.mrf.mxu0
      %v355 = vadd.f32 0.0, %v354
      %v356 = vpop.f32.mrf.mxu0
      %v357 = vadd.f32 0.0, %v356
      %358 = vmatmul.bf16.gmra.mxu0 %v241
      %v359 = vpop.f32.mrf.mxu0
      %v360 = vadd.f32 0.0, %v359
      %v361 = vpop.f32.mrf.mxu0
      %v362 = vadd.f32 0.0, %v361
      %363 = vmatmul.bf16.gmra.mxu0 %v242
      %v364 = vpop.f32.mrf.mxu0
      %v365 = vadd.f32 0.0, %v364
      %v366 = vpop.f32.mrf.mxu0
      %v367 = vadd.f32 0.0, %v366
      %368 = vmatmul.bf16.gmra.mxu0 %v243
      %v369 = vpop.f32.mrf.mxu0
      %v370 = vadd.f32 0.0, %v369
      %v371 = vpop.f32.mrf.mxu0
      %v372 = vadd.f32 0.0, %v371
      %373 = vdwg.mxu0
      %v374 = vadd.f32 %v301, %v335
      %v375 = vadd.f32 %v302, %v337
      %v376 = vadd.f32 %v303, %v340
      %v377 = vadd.f32 %v304, %v342
      %v378 = vadd.f32 %v305, %v345
      %v379 = vadd.f32 %v306, %v347
      %v380 = vadd.f32 %v307, %v350
      %v381 = vadd.f32 %v308, %v352
      %v382 = vadd.f32 %v309, %v355
      %v383 = vadd.f32 %v310, %v357
      %v384 = vadd.f32 %v311, %v360
      %v385 = vadd.f32 %v312, %v362
      %v386 = vadd.f32 %v313, %v365
      %v387 = vadd.f32 %v314, %v367
      %v388 = vadd.f32 %v315, %v370
      %v389 = vadd.f32 %v316, %v372
      %v390 = vpack.c.bf16 %v337, %v335
      %v391 = vpack.c.bf16 %v342, %v340
      %v392 = vpack.c.bf16 %v347, %v345
      %v393 = vpack.c.bf16 %v352, %v350
      %v394 = vpack.c.bf16 %v357, %v355
      %v395 = vpack.c.bf16 %v362, %v360
      %v396 = vpack.c.bf16 %v367, %v365
      %v397 = vpack.c.bf16 %v372, %v370
      %398 = vmatpush.bf16.msra.mxu0 %v397
      %399 = vmatpush.bf16.msra.mxu0 %v396
      %400 = vmatpush.bf16.msra.mxu0 %v395
      %401 = vmatpush.bf16.msra.mxu0 %v394
      %402 = vmatpush.bf16.msra.mxu0 %v393
      %403 = vmatpush.bf16.msra.mxu0 %v392
      %404 = vmatpush.bf16.msra.mxu0 %v391
      %405 = vmatpush.bf16.msra.mxu0 %v390
      %406 = vmatmul.bf16.gmra.mxu0 %v236
      %v407 = vpop.f32.mrf.mxu0
      %v408 = vadd.f32 0.0, %v407
      %v409 = vpop.f32.mrf.mxu0
      %v410 = vadd.f32 0.0, %v409
      %411 = vmatmul.bf16.gmra.mxu0 %v237
      %v412 = vpop.f32.mrf.mxu0
      %v413 = vadd.f32 0.0, %v412
      %v414 = vpop.f32.mrf.mxu0
      %v415 = vadd.f32 0.0, %v414
      %416 = vmatmul.bf16.gmra.mxu0 %v238
      %v417 = vpop.f32.mrf.mxu0
      %v418 = vadd.f32 0.0, %v417
      %v419 = vpop.f32.mrf.mxu0
      %v420 = vadd.f32 0.0, %v419
      %421 = vmatmul.bf16.gmra.mxu0 %v239
      %v422 = vpop.f32.mrf.mxu0
      %v423 = vadd.f32 0.0, %v422
      %v424 = vpop.f32.mrf.mxu0
      %v425 = vadd.f32 0.0, %v424
      %426 = vmatmul.bf16.gmra.mxu0 %v240
      %v427 = vpop.f32.mrf.mxu0
      %v428 = vadd.f32 0.0, %v427
      %v429 = vpop.f32.mrf.mxu0
      %v430 = vadd.f32 0.0, %v429
      %431 = vmatmul.bf16.gmra.mxu0 %v241
      %v432 = vpop.f32.mrf.mxu0
      %v433 = vadd.f32 0.0, %v432
      %v434 = vpop.f32.mrf.mxu0
      %v435 = vadd.f32 0.0, %v434
      %436 = vmatmul.bf16.gmra.mxu0 %v242
      %v437 = vpop.f32.mrf.mxu0
      %v438 = vadd.f32 0.0, %v437
      %v439 = vpop.f32.mrf.mxu0
      %v440 = vadd.f32 0.0, %v439
      %441 = vmatmul.bf16.gmra.mxu0 %v243
      %v442 = vpop.f32.mrf.mxu0
      %v443 = vadd.f32 0.0, %v442
      %v444 = vpop.f32.mrf.mxu0
      %v445 = vadd.f32 0.0, %v444
      %446 = vdwg.mxu0
      %v447 = vadd.f32 %v374, %v408
      %v448 = vadd.f32 %v375, %v410
      %v449 = vadd.f32 %v376, %v413
      %v450 = vadd.f32 %v377, %v415
      %v451 = vadd.f32 %v378, %v418
      %v452 = vadd.f32 %v379, %v420
      %v453 = vadd.f32 %v380, %v423
      %v454 = vadd.f32 %v381, %v425
      %v455 = vadd.f32 %v382, %v428
      %v456 = vadd.f32 %v383, %v430
      %v457 = vadd.f32 %v384, %v433
      %v458 = vadd.f32 %v385, %v435
      %v459 = vadd.f32 %v386, %v438
      %v460 = vadd.f32 %v387, %v440
      %v461 = vadd.f32 %v388, %v443
      %v462 = vadd.f32 %v389, %v445
      %v463 = vmul.f32 %v447, 0.25
      %v464 = vmul.f32 %v448, 0.25
      %v465 = vmul.f32 %v449, 0.25
      %v466 = vmul.f32 %v450, 0.25
      %v467 = vmul.f32 %v451, 0.25
      %v468 = vmul.f32 %v452, 0.25
      %v469 = vmul.f32 %v453, 0.25
      %v470 = vmul.f32 %v454, 0.25
      %v471 = vmul.f32 %v455, 0.25
      %v472 = vmul.f32 %v456, 0.25
      %v473 = vmul.f32 %v457, 0.25
      %v474 = vmul.f32 %v458, 0.25
      %v475 = vmul.f32 %v459, 0.25
      %v476 = vmul.f32 %v460, 0.25
      %v477 = vmul.f32 %v461, 0.25
      %v478 = vmul.f32 %v462, 0.25
      %vm479 = vcmask 523264
      %480 = vst.msk [vmem:[%s163] sm:$0xff] %vm479, %v463
      %481 = vst.msk [vmem:[%s163 + $0x8] sm:$0xff] %vm479, %v464
      %482 = vst.msk [vmem:[%s163 + $0x10] sm:$0xff] %vm479, %v465
      %483 = vst.msk [vmem:[%s163 + $0x18] sm:$0xff] %vm479, %v466
      %484 = vst.msk [vmem:[%s163 + $0x20] sm:$0xff] %vm479, %v467
      %485 = vst.msk [vmem:[%s163 + $0x28] sm:$0xff] %vm479, %v468
      %486 = vst.msk [vmem:[%s163 + $0x30] sm:$0xff] %vm479, %v469
      %487 = vst.msk [vmem:[%s163 + $0x38] sm:$0xff] %vm479, %v470
      %488 = vst.msk [vmem:[%s163 + $0x40] sm:$0xff] %vm479, %v471
      %489 = vst.msk [vmem:[%s163 + $0x48] sm:$0xff] %vm479, %v472
      %490 = vst.msk [vmem:[%s163 + $0x50] sm:$0xff] %vm479, %v473
      %491 = vst.msk [vmem:[%s163 + $0x58] sm:$0xff] %vm479, %v474
      %492 = vst.msk [vmem:[%s163 + $0x60] sm:$0xff] %vm479, %v475
      %493 = vst.msk [vmem:[%s163 + $0x68] sm:$0xff] %vm479, %v476
      %494 = vst.msk [vmem:[%s163 + $0x70] sm:$0xff] %vm479, %v477
      %495 = vst.msk [vmem:[%s163 + $0x78] sm:$0xff] %vm479, %v478
      %p496 = scmp.lt.s32.totalorder %s13, 1
      %s497 = scalar_select %p496, %s13, 1
      %s498 = smul.addr %s497, 16
      %s499 = smul.addr %s498, 8
      %s500 = scalar_lea.vmem %s2, %s499
      // Predicated region
      $region29: #{lightgcn_forward.1} parent=27 // pred_check
        %p501 = pneg %p83
      $region30: #{lightgcn_forward.1} parent=27 // pred_check_branch
        %503 = sbr.rel (%p501) target = $region32
      $region31: #{lightgcn_forward.1} parent=27 // pred_region
        _
      $region32: #{lightgcn_forward.1} parent=27 // pred_fallthru
        _
    $region28: #{lightgcn_forward.1} parent=5 // pred_fallthru
      _
    %p504 = scmp.le.s32.totalorder 2, %s8
    // Predicated region
    $region33: #{lightgcn_forward.1} parent=5 // pred_check
      %p505 = pneg %p504
    $region34: #{lightgcn_forward.1} parent=5 // pred_check_branch
      %507 = sbr.rel (%p505) target = $region36
    $region35: #{lightgcn_forward.1} parent=5 // pred_region
      %s508 = ssub.s32 %s8, 2
      // Predicated region
      $region37: #{lightgcn_forward.1} parent=35 // pred_check
        %p509 = pneg %p89
      $region38: #{lightgcn_forward.1} parent=35 // pred_check_branch
        %511 = sbr.rel (%p509) target = $region40
      $region39: #{lightgcn_forward.1} parent=35 // pred_region
        %p512 = scmp.lt.s32.totalorder %s14, 1
        %s513 = scalar_select %p512, %s14, 1
        %s514 = smul.addr %s513, 16
        %s515 = smul.addr %s514, 8
        %s516 = scalar_lea.vmem %s2, %s515
      $region40: #{lightgcn_forward.1} parent=35 // pred_fallthru
        _
    $region36: #{lightgcn_forward.1} parent=5 // pred_fallthru
      _
  $region6: #{lightgcn_forward.1} parent=0 // loop_footer
    %s12 = sadd.s32 1, %s8
  $region7: #{lightgcn_forward.1} parent=0 // loop_footer_branch
    %7 = sbr.rel target = $region3
  $region8: #{lightgcn_forward.1} parent=0 // loop_exit
    _

</llo_original>
